<compile_context>
chip_gen: v7x
topology: tpu7x:2x2x1
jax: 0.10.0
libtpu: 0.0.40
codegen_flags: <defaults>
</compile_context>

<pallas_src>
import functools

import jax
import jax.numpy as jnp
from jax.experimental import pallas as pl
from jax.experimental.pallas import tpu as pltpu


def _patch_embed_kernel(patches_ref, w_ref, b_ref, out_ref):
    # patches_ref: (tm, K) bf16 (streamed)   | w_ref: (K, E) bf16 (VMEM-resident: constant index_map)
    # b_ref:       (1, E) f32  (resident)    | out_ref: (tm, E) in x.dtype
    acc = jnp.dot(patches_ref[...], w_ref[...], preferred_element_type=jnp.float32)
    out_ref[...] = (acc + b_ref[...]).astype(out_ref.dtype)


def _round_up(x, m):
    return ((x + m - 1) // m) * m


def _max_row_tile(k_dim, e_dim, lhs_bytes, out_bytes,
                  budget_bytes=12 * 1024 * 1024, cap=1024):
    """Largest 128-multiple row tile whose double-buffered footprint fits the VMEM budget.

    Budget is kept under the 16 MiB v5e scoped default (v6e/v7x have 32 MiB), so no
    vmem_limit_bytes override is needed on any generation.
    """
    weight_bytes = 2 * k_dim * e_dim * lhs_bytes          # conservatively assume 2 buffers
    per_row = 2 * k_dim * lhs_bytes + 2 * e_dim * out_bytes
    avail = max(budget_bytes - weight_bytes, 0)
    rows = (avail // max(per_row, 1)) // 128 * 128
    return int(max(128, min(cap, rows)))


def _choose_row_tile(m, n_per_image, max_rows):
    """Row tile that divides M exactly whenever possible (no padding / output slice)."""
    if m <= max_rows:
        return m                                          # single step, full-dim block
    best = None
    for k in range(max(1, max_rows // n_per_image), 0, -1):
        tm = k * n_per_image                              # whole images per tile
        if tm <= max_rows and m % tm == 0 and tm % 8 == 0:
            if best is None:
                best = tm
            if (m // tm) % 2 == 0:                        # even step count: balances v7x's 2 TCs
                return tm
    if best is not None:
        return best
    # Rare fallback (no exact divisor): 128-multiple tile minimizing the padding tax.
    best_tm, best_pad = max_rows, _round_up(m, max_rows) - m
    tm = max_rows
    while tm - 128 >= 256:
        tm -= 128
        pad = _round_up(m, tm) - m
        if pad < best_pad:
            best_tm, best_pad = tm, pad
    return best_tm


def prepare_patch_embedding_params(weight, bias, compute_dtype=jnp.bfloat16):
    """One-time parameter prep (hoisted out of the per-call path).

    weight: (E, 3, P, P) PyTorch Conv2d OIHW; bias: (E,).
    Returns (w_mat (K, E) compute_dtype, b_row (1, E) f32) with K = 3*P*P, rows ordered (c, ph, pw).
    """
    E, C, P, _ = weight.shape
    K = C * P * P
    w_mat = weight.reshape(E, K).T.astype(compute_dtype)  # (K, E)
    b_row = bias.astype(jnp.float32).reshape(1, E)
    return w_mat, b_row


@functools.partial(jax.jit, static_argnames=("patch_size", "compute_dtype"))
def patch_embedding(x, w_mat, b_row, *, patch_size, compute_dtype=jnp.bfloat16):
    """x: (B, 3, H, W); w_mat/b_row from prepare_patch_embedding_params.
    Returns (B, num_patches, E) in x.dtype, matching PyTorch PatchEmbedding.forward."""
    B, C, H, W = x.shape
    P = patch_size
    Hp, Wp = H // P, W // P
    N = Hp * Wp
    K, E = w_mat.shape
    M = B * N
    out_dtype = x.dtype

    if H != Hp * P or W != Wp * P:                        # Conv2d floor semantics
        x = x[:, :, :Hp * P, :Wp * P]

    # im2col pre-pass: cast fuses with the transpose under jit (single read of x, single bf16
    # write); per-patch column order (c, ph, pw) matches the OIHW weight reshape.
    patches = x.astype(compute_dtype).reshape(B, C, Hp, P, Wp, P)
    patches = patches.transpose(0, 2, 4, 1, 3, 5).reshape(M, K)   # rows = (b, hp, wp)

    lhs_bytes = jnp.dtype(compute_dtype).itemsize
    out_bytes = jnp.dtype(out_dtype).itemsize
    max_rows = _max_row_tile(K, E, lhs_bytes, out_bytes)
    tm = _choose_row_tile(M, N, max_rows)
    Mp = _round_up(M, tm)
    if Mp != M:                                           # rare path only
        patches = jnp.pad(patches, ((0, Mp - M), (0, 0)))
    n_steps = Mp // tm

    cost = pl.CostEstimate(
        flops=2 * Mp * K * E,
        transcendentals=0,
        bytes_accessed=Mp * K * lhs_bytes + K * E * lhs_bytes + E * 4 + Mp * E * out_bytes,
    )

    out = pl.pallas_call(
        _patch_embed_kernel,
        out_shape=jax.ShapeDtypeStruct((Mp, E), out_dtype),
        grid_spec=pltpu.PrefetchScalarGridSpec(
            num_scalar_prefetch=0,
            grid=(n_steps,),
            in_specs=[
                pl.BlockSpec((tm, K), lambda i: (i, 0)),   # streamed activation tile
                pl.BlockSpec((K, E), lambda i: (0, 0)),    # weight: constant index -> stays resident
                pl.BlockSpec((1, E), lambda i: (0, 0)),    # bias row
            ],
            out_specs=pl.BlockSpec((tm, E), lambda i: (i, 0)),
        ),
        compiler_params=pltpu.CompilerParams(
            dimension_semantics=("parallel",)),
        cost_estimate=cost,
    )(patches, w_mat, b_row)

    if Mp != M:
        out = out[:M]
    return out.reshape(B, N, E)


if __name__ == "__main__":
    # Small deterministic setup consistent with the module: in_channels fixed at 3.
    B, C, H, W = 2, 3, 16, 16
    patch_size = 4
    embed_dim = 32

    key = jax.random.PRNGKey(0)
    kx, kw, kb = jax.random.split(key, 3)
    x = jax.random.normal(kx, (B, C, H, W), dtype=jnp.float32)
    weight = jax.random.normal(kw, (embed_dim, C, patch_size, patch_size),
                               dtype=jnp.float32) * 0.05
    bias = jax.random.normal(kb, (embed_dim,), dtype=jnp.float32) * 0.05

    # One-time param prep (hoisted), then the kernel call.
    w_mat, b_row = prepare_patch_embedding_params(weight, bias)
    out = patch_embedding(x, w_mat, b_row, patch_size=patch_size)
    out = jax.block_until_ready(out)

    # Reference: strided conv (PyTorch NCHW/OIHW semantics) + flatten(2).transpose(1,2).
    ref = jax.lax.conv_general_dilated(
        x, weight, window_strides=(patch_size, patch_size), padding="VALID",
        dimension_numbers=("NCHW", "OIHW", "NCHW"))
    ref = ref + bias.reshape(1, embed_dim, 1, 1)
    ref = ref.reshape(B, embed_dim, -1).transpose(0, 2, 1)

    num_patches = (H // patch_size) * (W // patch_size)
    assert out.shape == (B, num_patches, embed_dim)
    assert out.dtype == x.dtype
    # bf16 operands + f32 accumulate -> loosened tolerance vs the f32 reference.
    assert jnp.allclose(out, ref, atol=2e-2, rtol=2e-2)
    print("KERNEL_OK")
</pallas_src>

<mosaic_0001>
module attributes {stable_mosaic.version = 11 : i64} {
  func.func @_patch_embed_kernel(%arg0: i32, %arg1: memref<32x48xbf16, #tpu.memory_space<vmem>>, %arg2: memref<48x32xbf16, #tpu.memory_space<vmem>>, %arg3: memref<1x32xf32, #tpu.memory_space<vmem>>, %arg4: memref<32x32xf32, #tpu.memory_space<vmem>>) attributes {dimension_semantics = [#tpu.dimension_semantics<parallel>], iteration_bounds = array<i64: 1>, scalar_prefetch = 0 : i64, scratch_operands = 0 : i64, tpu.core_type = #tpu.core_type<tc>, window_params = [{transform_indices = @transform_0, window_bounds = array<i64: 32, 48>}, {pipeline_mode = #tpu.pipeline_mode<synchronous>, transform_indices = @transform_1, window_bounds = array<i64: 48, 32>}, {pipeline_mode = #tpu.pipeline_mode<synchronous>, transform_indices = @transform_2, window_bounds = array<i64: 1, 32>}, {transform_indices = @transform_3, window_bounds = array<i64: 32, 32>}]} {
    %c0 = arith.constant 0 : index
    %c0_0 = arith.constant 0 : index
    %0 = vector.load %arg1[%c0, %c0_0] : memref<32x48xbf16, #tpu.memory_space<vmem>>, vector<32x48xbf16>
    %c0_1 = arith.constant 0 : index
    %c0_2 = arith.constant 0 : index
    %1 = vector.load %arg2[%c0_1, %c0_2] : memref<48x32xbf16, #tpu.memory_space<vmem>>, vector<48x32xbf16>
    %cst = arith.constant dense<0.000000e+00> : vector<32x32xf32>
    %2 = tpu.matmul %0, %1, %cst {dimension_numbers = #tpu.dot_dimension_numbers<[1], [0], [0], [1], [0, 0, 1, 1], [], []>} : vector<32x48xbf16>, vector<48x32xbf16>, vector<32x32xf32> -> vector<32x32xf32>
    %c0_3 = arith.constant 0 : index
    %c0_4 = arith.constant 0 : index
    %3 = vector.load %arg3[%c0_3, %c0_4] : memref<1x32xf32, #tpu.memory_space<vmem>>, vector<1x32xf32>
    %4 = vector.broadcast %3 : vector<1x32xf32> to vector<32x32xf32>
    %5 = arith.addf %2, %4 : vector<32x32xf32>
    %c0_5 = arith.constant 0 : index
    %c0_6 = arith.constant 0 : index
    %6 = vector.load %arg4[%c0_5, %c0_6] : memref<32x32xf32, #tpu.memory_space<vmem>>, vector<32x32xf32>
    tpu.vector_store %arg4[%c0_5, %c0_6], %5 {strides = array<i32>} : memref<32x32xf32, #tpu.memory_space<vmem>>, vector<32x32xf32>,
    return
  }
  func.func @transform_0(%arg0: i32) -> (i32, i32) {
    %c0_i32 = arith.constant 0 : i32
    %c0_i32_0 = arith.constant 0 : i32
    return %arg0, %c0_i32 : i32, i32
  }
  func.func @transform_1(%arg0: i32) -> (i32, i32) {
    %c0_i32 = arith.constant 0 : i32
    %c0_i32_0 = arith.constant 0 : i32
    %c0_i32_1 = arith.constant 0 : i32
    return %c0_i32, %c0_i32_0 : i32, i32
  }
  func.func @transform_2(%arg0: i32) -> (i32, i32) {
    %c0_i32 = arith.constant 0 : i32
    %c0_i32_0 = arith.constant 0 : i32
    %c0_i32_1 = arith.constant 0 : i32
    return %c0_i32, %c0_i32_0 : i32, i32
  }
  func.func @transform_3(%arg0: i32) -> (i32, i32) {
    %c0_i32 = arith.constant 0 : i32
    %c0_i32_0 = arith.constant 0 : i32
    return %arg0, %c0_i32 : i32, i32
  }
}

</mosaic_0001>

<llo_original>
// kernel: patch_embedding.1
$region0: #{patch_embedding.1}
  #allocation0 [shape = 'u32[]', space=smem, size = 0x4, offset = 0x4, fixed_abs, tag = 'smem constant byte address 0x4 - core index']
  #allocation1 [shape = 'u32[144,128]{1,0:T(1,128)}', space=vmem, size = 0x12000, scoped, tag = 'internal scratch']
  %s0 = inlined_call_operand.vmem [shape: bf16[32,48], index: 0, kind: input, shape index: {}]
  %s1 = inlined_call_operand.vmem [shape: bf16[48,32], index: 1, kind: input, shape index: {}]
  %s2 = inlined_call_operand.vmem [shape: f32[1,32], index: 2, kind: input, shape index: {}]
  %s3 = inlined_call_operand.hbm [shape: f32[32,32], index: 3, kind: output, shape index: {}]
  %s4 = sld [smem:[#allocation0]]
  $region22: #{patch_embedding.1} parent=0
    _
  %s6 = ssub.s32 1, %s4
  %s7 = scalar_select 0, %s6, %s4
  $region1: #{patch_embedding.1} parent=0
    #allocation2 [shape = 'u8[16384]{0}', space=vmem, size = 0x4000, scoped, tag = 'output window, operand 0, single buffered']
    #allocation3 [shape = 's32[1]{0}', space=sflag, size = 0x4, scoped, tag = 'scoped memory for patch_embedding.1']
    %8 = vsyncpa [#allocation3], 0
    // Predicated region
    $region2: #{patch_embedding.1} parent=1 // pred_check
      _
    $region3: #{patch_embedding.1} parent=1 // pred_check_branch
      %10 = sbr.rel (0) target = $region5
    $region4: #{patch_embedding.1} parent=1 // pred_region
      _
    $region5: #{patch_embedding.1} parent=1 // pred_fallthru
      _
    // Predicated region
    $region6: #{patch_embedding.1} parent=1 // pred_check
      _
    $region7: #{patch_embedding.1} parent=1 // pred_check_branch
      %12 = sbr.rel (0) target = $region9
    $region8: #{patch_embedding.1} parent=1 // pred_region
      _
    $region9: #{patch_embedding.1} parent=1 // pred_fallthru
      _
    // Predicated region
    $region10: #{patch_embedding.1} parent=1 // pred_check
      _
    $region11: #{patch_embedding.1} parent=1 // pred_check_branch
      %14 = sbr.rel (0) target = $region13
    $region12: #{patch_embedding.1} parent=1 // pred_region
      _
    $region13: #{patch_embedding.1} parent=1 // pred_fallthru
      _
    %v16 = vld [vmem:[%s0] sm:$0xf]
    %v17 = vld [vmem:[%s0 + $0x4] sm:$0xf]
    %v18 = vld [vmem:[%s0 + $0x8] sm:$0xf]
    %v19 = vld [vmem:[%s0 + $0xc] sm:$0xf]
    %v20 = vld [vmem:[%s1] sm:$0xf]
    %v21 = vld [vmem:[%s1 + $0x4] sm:$0xf]
    %v22 = vld [vmem:[%s1 + $0x8] sm:$0xf]
    %v23 = vld [vmem:[%s1 + $0xc] sm:$0xf]
    %v24 = vld [vmem:[%s1 + $0x10] sm:$0xf]
    %v25 = vld [vmem:[%s1 + $0x14] sm:$0xf]
    %v26 = vld [vmem:[%s2] sm:$0x1]
    %v28 = vlaneseq
    %v29 = vshrl.u32 %v28, 7
    %v30 = vsub.s32 0, %v29
    %v31 = vrot.slane %v26, %v30
    %v37 = vunpack.c.l.b16 %v16
    %v38 = vunpack.c.l.b16 %v17
    %v39 = vunpack.c.l.b16 %v18
    %v40 = vunpack.c.l.b16 %v19
    %v41 = vpack.c.b16 %v38, %v37
    %v42 = vpack.c.b16 %v40, %v39
    %v49 = vunpack.c.l.b16 %v20
    %v50 = vunpack.c.l.b16 %v21
    %v51 = vunpack.c.l.b16 %v22
    %v52 = vunpack.c.l.b16 %v23
    %v53 = vunpack.c.l.b16 %v24
    %v54 = vunpack.c.l.b16 %v25
    %v55 = vpack.c.b16 %v50, %v49
    %v56 = vpack.c.b16 %v52, %v51
    %v57 = vpack.c.b16 %v54, %v53
    %vm61 = vcmask 392192
    %v63 = vsel %vm61, %v41, 0
    %v66 = vsel %vm61, %v42, 0
    %68 = vmatprep.subr.bf16.mxu0 0
    %69 = vmatpush1.bf16.msra.mxu0 %v55
    %70 = vmatprep.subr.bf16.mxu0 0
    %71 = vmatpush1.bf16.msra.mxu0 %v56
    %72 = vmatprep.subr.bf16.mxu0 0
    %73 = vmatpush1.bf16.msra.mxu0 %v57
    %74 = vmatprep.subr.bf16.mxu0 0
    %75 = vmatpush1.bf16.msra.mxu0 0
    %76 = vmatprep.subr.bf16.mxu0 0
    %77 = vmatpush1.bf16.msra.mxu0 0
    %78 = vmatprep.subr.bf16.mxu0 0
    %79 = vmatpush1.bf16.msra.mxu0 0
    %80 = vmatprep.subr.bf16.mxu0 0
    %81 = vmatpush1.bf16.msra.mxu0 0
    %82 = vmatprep.subr.bf16.mxu0 0
    %83 = vmatpush1.bf16.msra.mxu0 0
    %84 = vmatprep.subr.bf16.mxu0 0
    %85 = vmatpush1.bf16.msra.mxu0 0
    %86 = vmatprep.subr.bf16.mxu0 0
    %87 = vmatpush1.bf16.msra.mxu0 0
    %88 = vmatprep.subr.bf16.mxu0 0
    %89 = vmatpush1.bf16.msra.mxu0 0
    %90 = vmatprep.subr.bf16.mxu0 0
    %91 = vmatpush1.bf16.msra.mxu0 0
    %92 = vmatprep.subr.bf16.mxu0 0
    %93 = vmatpush1.bf16.msra.mxu0 0
    %94 = vmatprep.subr.bf16.mxu0 0
    %95 = vmatpush1.bf16.msra.mxu0 0
    %96 = vmatprep.subr.bf16.mxu0 0
    %97 = vmatpush1.bf16.msra.mxu0 0
    %98 = vmatprep.subr.bf16.mxu0 0
    %99 = vmatpush1.bf16.msra.mxu0 0
    %100 = vmatprep.mubr.bf16.mxu0 0
    %101 = vmatmul.mubr.bf16.gmra.mrb[0].mxu0 %v63
    %v102 = vpop.f32.mrb[0].mxu0
    %v103 = vadd.f32 %v31, %v102
    %v104 = vpop.f32.mrb[0].mxu0
    %v105 = vpop.f32.mrb[0].mxu0
    %v106 = vadd.f32 %v31, %v105
    %v107 = vpop.f32.mrb[0].mxu0
    %108 = vmatprep.mubr.bf16.mxu0 0
    %109 = vmatmul.mubr.bf16.gmra.mrb[0].mxu0 %v66
    %v110 = vpop.f32.mrb[0].mxu0
    %v111 = vadd.f32 %v31, %v110
    %v112 = vpop.f32.mrb[0].mxu0
    %v113 = vpop.f32.mrb[0].mxu0
    %v114 = vadd.f32 %v31, %v113
    %v115 = vpop.f32.mrb[0].mxu0
    %116 = vdwg.mxu0
    %vm117 = vcmask 261120
    %118 = vst.msk [vmem:[#allocation2] sm:$0xff] %vm117, %v103
    %119 = vst.msk [vmem:[#allocation2 + $0x8] sm:$0xff] %vm117, %v106
    %120 = vst.msk [vmem:[#allocation2 + $0x10] sm:$0xff] %vm117, %v111
    %121 = vst.msk [vmem:[#allocation2 + $0x18] sm:$0xff] %vm117, %v114
    // Predicated region
    $region14: #{patch_embedding.1} parent=1 // pred_check
      _
    $region15: #{patch_embedding.1} parent=1 // pred_check_branch
      %123 = sbr.rel (0) target = $region17
    $region16: #{patch_embedding.1} parent=1 // pred_region
      %s125 = ssub.s32 512, 512
      %126 = vsyncadd [#allocation3], %s125
      %s127 = sshll.u32 [#allocation2], 4
      %s128 = int_to_ptr.vmem [resolvable:$true] %s127
      %133 = dma.vmem_to_hbm [thread:$0]  %s128, 512, %s3, [#allocation3], 128, 128, 8
    $region17: #{patch_embedding.1} parent=1 // pred_fallthru
      _
    // Predicated region
    $region18: #{patch_embedding.1} parent=1 // pred_check
      _
    $region19: #{patch_embedding.1} parent=1 // pred_check_branch
      %135 = sbr.rel (0) target = $region21
    $region20: #{patch_embedding.1} parent=1 // pred_region
      %136 = dma.done [#allocation3], 512
    $region21: #{patch_embedding.1} parent=1 // pred_fallthru
      _
    %137 = vsyncpa [#allocation3], 1

</llo_original>
